<compile_context>
chip_gen: v5e
topology: v5e:2x2
jax: 0.10.0
libtpu: 0.0.40
codegen_flags: <defaults>
</compile_context>

<pallas_src>
import functools

import jax
import jax.numpy as jnp
from jax import lax
from jax.experimental import pallas as pl
from jax.experimental.pallas import tpu as pltpu


def _round_up(x, m):
    return (x + m - 1) // m * m


def _pick_p_tile(P, Kpad, Cpad, budget_bytes):
    """Largest P-tile (multiple of 8, starting at 2048) whose double-buffered
    working set (bf16 patches tile + f32 out tile + bf16 weight) fits the
    generation-aware VMEM budget."""
    tp = max(8, min(2048, _round_up(P, 8)))

    def need(t):
        return 2 * (t * Kpad * 2 + t * Cpad * 4) + 2 * Kpad * Cpad * 2

    while tp > 8 and need(tp) > budget_bytes:
        tp = max(8, _round_up(tp // 2, 8))
    return tp


# ---------------------------------------------------------------------------
# Pallas kernels
# ---------------------------------------------------------------------------
def _stats_kernel(p_ref, w_ref, sum_ref, ssq_ref):
    # Recompute path pass 1: stats only (no conv intermediate in HBM).
    # p_ref : [TP, Kpad] bf16 (padded rows/cols are exact zeros)
    # w_ref : [Kpad, Cpad] bf16
    # sum_ref / ssq_ref : [8, Cpad] f32 per-core partial stats (row 0 used),
    #                     resident across the "arbitrary" P axis.
    j = pl.program_id(1)

    @pl.when(j == 0)
    def _init():
        sum_ref[...] = jnp.zeros_like(sum_ref)
        ssq_ref[...] = jnp.zeros_like(ssq_ref)

    acc = jnp.dot(p_ref[...], w_ref[...],
                  preferred_element_type=jnp.float32)   # MXU bf16 in / f32 acc
    sum_ref[0:1, :] += jnp.sum(acc, axis=0, keepdims=True)
    ssq_ref[0:1, :] += jnp.sum(acc * acc, axis=0, keepdims=True)


def _conv_stats_kernel(p_ref, w_ref, conv_ref, sum_ref, ssq_ref):
    # Materialize path pass 1: bf16 conv intermediate + per-core stats.
    j = pl.program_id(1)

    @pl.when(j == 0)
    def _init():
        sum_ref[...] = jnp.zeros_like(sum_ref)
        ssq_ref[...] = jnp.zeros_like(ssq_ref)

    acc = jnp.dot(p_ref[...], w_ref[...],
                  preferred_element_type=jnp.float32)
    conv_ref[...] = acc.astype(conv_ref.dtype)          # bf16 write (half traffic)
    sum_ref[0:1, :] += jnp.sum(acc, axis=0, keepdims=True)
    ssq_ref[0:1, :] += jnp.sum(acc * acc, axis=0, keepdims=True)


def _conv_affine_lrelu_kernel(p_ref, w_ref, scale_ref, shift_ref, o_ref, *, slope):
    # Recompute path pass 2: redo the matmul, then BN-affine + LeakyReLU.
    acc = jnp.dot(p_ref[...], w_ref[...],
                  preferred_element_type=jnp.float32)
    y = acc * scale_ref[...] + shift_ref[...]
    o_ref[...] = jnp.where(y >= 0, y, slope * y).astype(o_ref.dtype)


def _affine_lrelu_kernel(conv_ref, scale_ref, shift_ref, o_ref, *, slope):
    # Materialize path pass 2: 1 FMA + 1 select per element on the bf16 conv.
    y = conv_ref[...].astype(jnp.float32) * scale_ref[...] + shift_ref[...]
    o_ref[...] = jnp.where(y >= 0, y, slope * y).astype(o_ref.dtype)


# ---------------------------------------------------------------------------
# Wrapper
# ---------------------------------------------------------------------------
def cnn_block_forward(x, weight, gamma, beta, noise=None,
                      stride=2, eps=1e-5, slope=0.2):
    """Forward pass of CNNBlock. x: [N, Cin, H, W] (NCHW), weight: [Cout, Cin, KH, KW]."""
    N, Cin, H, W = x.shape
    Cout, _, KH, KW = weight.shape
    Ho = (H - KH) // stride + 1
    Wo = (W - KW) // stride + 1
    P = N * Ho * Wo
    K = Cin * KH * KW

    # GaussianNoise (training mode): fused with the bf16 cast feeding the
    # patch extraction (no standalone elementwise kernel / extra HBM pass).
    xb = x + noise if noise is not None else x
    xb = xb.astype(jnp.bfloat16)

    # One fused patch-extraction op; NHWC out spec makes the [P, K] reshape
    # free. Feature order is (cin, kh, kw) — matches weight.reshape(Cout, K).
    patches = lax.conv_general_dilated_patches(
        xb, filter_shape=(KH, KW), window_strides=(stride, stride),
        padding='VALID', dimension_numbers=('NCHW', 'OIHW', 'NHWC'))
    patches = patches.reshape(P, K)
    w2 = weight.reshape(Cout, K).T.astype(jnp.bfloat16)   # [K, Cout]

    # Whole-K / whole-Cout single blocks (no K-tiling below 256); lane-dense
    # multiples of 128.
    Kpad = _round_up(K, 128)
    Cpad = _round_up(Cout, 128)

    try:
        vmem_cap = int(pltpu.get_tpu_info().vmem_capacity_bytes)
    except Exception:
        vmem_cap = 64 * 1024 * 1024          # conservative: v7x physical VMEM
    budget = int(vmem_cap * 0.30)
    vmem_limit = min(int(vmem_cap * 0.45), 112 * 1024 * 1024)

    NC = 2                                   # leading "parallel" core axis (v7x)
    TP = _pick_p_tile(P, Kpad, Cpad, budget)
    Ppad = _round_up(P, NC * TP)
    tiles_per_core = Ppad // (NC * TP)

    patches_p = jnp.pad(patches, ((0, Ppad - P), (0, Kpad - K)))
    w_p = jnp.pad(w2, ((0, Kpad - K), (0, Cpad - Cout)))

    # Shape-conditional traffic plan: re-reading bf16 patches (2*Kpad B/row)
    # beats a bf16 conv-intermediate round trip (4*Cpad B/row) when
    # Kpad <= 2*Cpad.
    recompute = Kpad <= 2 * Cpad

    grid1 = (NC, tiles_per_core)
    sem1 = ("parallel", "arbitrary")
    p_spec1 = pl.BlockSpec((TP, Kpad), lambda c, j: (c * tiles_per_core + j, 0))
    w_spec1 = pl.BlockSpec((Kpad, Cpad), lambda c, j: (0, 0))
    stat_spec = pl.BlockSpec((8, Cpad), lambda c, j: (c, 0))
    stat_shape = jax.ShapeDtypeStruct((NC * 8, Cpad), jnp.float32)
    cparams1 = pltpu.CompilerParams(dimension_semantics=sem1,
                                    vmem_limit_bytes=vmem_limit)

    if recompute:
        s1, s2 = pl.pallas_call(
            _stats_kernel,
            out_shape=[stat_shape, stat_shape],
            grid=grid1,
            in_specs=[p_spec1, w_spec1],
            out_specs=[stat_spec, stat_spec],
            compiler_params=cparams1,
        )(patches_p, w_p)
        conv = None
    else:
        conv, s1, s2 = pl.pallas_call(
            _conv_stats_kernel,
            out_shape=[jax.ShapeDtypeStruct((Ppad, Cpad), jnp.bfloat16),
                       stat_shape, stat_shape],
            grid=grid1,
            in_specs=[p_spec1, w_spec1],
            out_specs=[pl.BlockSpec((TP, Cpad),
                                    lambda c, j: (c * tiles_per_core + j, 0)),
                       stat_spec, stat_spec],
            compiler_params=cparams1,
        )(patches_p, w_p)

    # Stats finalize (tiny, per channel): merge per-core partials, biased
    # variance, folded with gamma/beta into one scale/shift pair.  Padded
    # patch rows / channel columns are exact zeros, so only the divisor uses
    # the true P.
    gamma_p = jnp.pad(gamma.astype(jnp.float32), (0, Cpad - Cout))
    beta_p = jnp.pad(beta.astype(jnp.float32), (0, Cpad - Cout))
    cnt = jnp.float32(P)
    tot1 = jnp.sum(s1, axis=0)
    tot2 = jnp.sum(s2, axis=0)
    mean = tot1 / cnt
    # TODO(synk): E[x^2]-mean^2 in f32 is cancellation-prone for |mean|>>std;
    # a Welford/per-tile-centered merge would be more robust if needed.
    var = jnp.maximum(tot2 / cnt - mean * mean, 0.0)
    inv = lax.rsqrt(var + eps)
    scale = (gamma_p * inv)[None, :]                    # [1, Cpad]
    shift = (beta_p - mean * gamma_p * inv)[None, :]    # [1, Cpad]

    grid2 = (Ppad // TP,)
    out_spec2 = pl.BlockSpec((TP, Cpad), lambda i: (i, 0))
    cparams2 = pltpu.CompilerParams(dimension_semantics=("parallel",),
                                    vmem_limit_bytes=vmem_limit)

    if recompute:
        out = pl.pallas_call(
            functools.partial(_conv_affine_lrelu_kernel, slope=slope),
            out_shape=jax.ShapeDtypeStruct((Ppad, Cpad), jnp.float32),
            grid=grid2,
            in_specs=[pl.BlockSpec((TP, Kpad), lambda i: (i, 0)),
                      pl.BlockSpec((Kpad, Cpad), lambda i: (0, 0)),
                      pl.BlockSpec((1, Cpad), lambda i: (0, 0)),
                      pl.BlockSpec((1, Cpad), lambda i: (0, 0))],
            out_specs=out_spec2,
            compiler_params=cparams2,
        )(patches_p, w_p, scale, shift)
    else:
        out = pl.pallas_call(
            functools.partial(_affine_lrelu_kernel, slope=slope),
            out_shape=jax.ShapeDtypeStruct((Ppad, Cpad), jnp.float32),
            grid=grid2,
            in_specs=[pl.BlockSpec((TP, Cpad), lambda i: (i, 0)),
                      pl.BlockSpec((1, Cpad), lambda i: (0, 0)),
                      pl.BlockSpec((1, Cpad), lambda i: (0, 0))],
            out_specs=out_spec2,
            compiler_params=cparams2,
        )(conv, scale, shift)

    # NCHW to match the PyTorch module.  (Between stacked blocks one would
    # keep the lane-dense flat [P, Cout] / NHWC layout and skip this.)
    y = out[:P, :Cout].reshape(N, Ho, Wo, Cout).transpose(0, 3, 1, 2)
    return y


# ---------------------------------------------------------------------------
# Pure-JAX reference (for self-check)
# ---------------------------------------------------------------------------
def cnn_block_ref(x, weight, gamma, beta, noise, stride=2, eps=1e-5, slope=0.2):
    xn = x + noise
    conv = lax.conv_general_dilated(
        xn.astype(jnp.float32), weight.astype(jnp.float32),
        window_strides=(stride, stride), padding='VALID',
        dimension_numbers=('NCHW', 'OIHW', 'NCHW'))
    mean = conv.mean(axis=(0, 2, 3), keepdims=True)
    var = ((conv - mean) ** 2).mean(axis=(0, 2, 3), keepdims=True)  # biased
    y = (conv - mean) * lax.rsqrt(var + eps)
    y = y * gamma[None, :, None, None] + beta[None, :, None, None]
    return jnp.where(y >= 0, y, slope * y)


if __name__ == "__main__":
    key = jax.random.PRNGKey(0)
    k_x, k_w, k_g, k_b, k_n = jax.random.split(key, 5)

    N, Cin, H, W = 2, 4, 16, 16
    Cout, KH, KW = 8, 4, 4
    std = 0.3

    x = jax.random.normal(k_x, (N, Cin, H, W), dtype=jnp.float32)
    weight = jax.random.normal(k_w, (Cout, Cin, KH, KW), dtype=jnp.float32) * 0.1
    gamma = 1.0 + 0.1 * jax.random.normal(k_g, (Cout,), dtype=jnp.float32)
    beta = 0.1 * jax.random.normal(k_b, (Cout,), dtype=jnp.float32)
    noise = std * jax.random.normal(k_n, x.shape, dtype=jnp.float32)

    fwd = jax.jit(cnn_block_forward)
    out = fwd(x, weight, gamma, beta, noise)
    out = jax.block_until_ready(out)

    ref = cnn_block_ref(x, weight, gamma, beta, noise)
    assert out.shape == (N, Cout, (H - KH) // 2 + 1, (W - KW) // 2 + 1)
    # bf16 MXU inputs -> relaxed tolerance vs the f32 reference.
    assert jnp.allclose(out, ref, atol=5e-2, rtol=5e-2), \
        f"max abs err {jnp.max(jnp.abs(out - ref))}"

    print("KERNEL_OK")
</pallas_src>

<mosaic_0001>
module attributes {stable_mosaic.version = 11 : i64} {
  func.func @_stats_kernel(%arg0: i32, %arg1: i32, %arg2: memref<104x128xbf16, #tpu.memory_space<vmem>>, %arg3: memref<128x128xbf16, #tpu.memory_space<vmem>>, %arg4: memref<8x128xf32, #tpu.memory_space<vmem>>, %arg5: memref<8x128xf32, #tpu.memory_space<vmem>>) attributes {dimension_semantics = [#tpu.dimension_semantics<parallel>, #tpu.dimension_semantics<arbitrary>], iteration_bounds = array<i64: 2, 1>, scalar_prefetch = 0 : i64, scratch_operands = 0 : i64, tpu.core_type = #tpu.core_type<tc>, window_params = [{transform_indices = @transform_0, window_bounds = array<i64: 104, 128>}, {pipeline_mode = #tpu.pipeline_mode<synchronous>, transform_indices = @transform_1, window_bounds = array<i64: 128, 128>}, {transform_indices = @transform_2, window_bounds = array<i64: 8, 128>}, {transform_indices = @transform_3, window_bounds = array<i64: 8, 128>}]} {
    %c0_i32 = arith.constant 0 : i32
    %0 = arith.cmpi eq, %arg1, %c0_i32 : i32
    %1 = arith.extui %0 : i1 to i32
    %c0_i32_0 = arith.constant 0 : i32
    %2 = arith.cmpi ne, %1, %c0_i32_0 : i32
    scf.if %2 {
      %cst_14 = arith.constant 0.000000e+00 : f32
      %17 = vector.broadcast %cst_14 : f32 to vector<8x128xf32>
      %c0_15 = arith.constant 0 : index
      %c0_16 = arith.constant 0 : index
      %18 = vector.load %arg4[%c0_15, %c0_16] : memref<8x128xf32, #tpu.memory_space<vmem>>, vector<8x128xf32>
      tpu.vector_store %arg4[%c0_15, %c0_16], %17 {strides = array<i32>} : memref<8x128xf32, #tpu.memory_space<vmem>>, vector<8x128xf32>,
      %cst_17 = arith.constant 0.000000e+00 : f32
      %19 = vector.broadcast %cst_17 : f32 to vector<8x128xf32>
      %c0_18 = arith.constant 0 : index
      %c0_19 = arith.constant 0 : index
      %20 = vector.load %arg5[%c0_18, %c0_19] : memref<8x128xf32, #tpu.memory_space<vmem>>, vector<8x128xf32>
      tpu.vector_store %arg5[%c0_18, %c0_19], %19 {strides = array<i32>} : memref<8x128xf32, #tpu.memory_space<vmem>>, vector<8x128xf32>,
    } else {
    }
    %c0 = arith.constant 0 : index
    %c0_1 = arith.constant 0 : index
    %3 = vector.load %arg2[%c0, %c0_1] : memref<104x128xbf16, #tpu.memory_space<vmem>>, vector<104x128xbf16>
    %c0_2 = arith.constant 0 : index
    %c0_3 = arith.constant 0 : index
    %4 = vector.load %arg3[%c0_2, %c0_3] : memref<128x128xbf16, #tpu.memory_space<vmem>>, vector<128x128xbf16>
    %cst = arith.constant dense<0.000000e+00> : vector<104x128xf32>
    %5 = tpu.matmul %3, %4, %cst {dimension_numbers = #tpu.dot_dimension_numbers<[1], [0], [0], [1], [0, 0, 1, 1], [], []>} : vector<104x128xbf16>, vector<128x128xbf16>, vector<104x128xf32> -> vector<104x128xf32>
    %c0_4 = arith.constant 0 : index
    %c0_5 = arith.constant 0 : index
    %6 = vector.load %arg4[%c0_4, %c0_5] : memref<8x128xf32, #tpu.memory_space<vmem>>, vector<1x128xf32>
    %cst_6 = arith.constant dense<0.000000e+00> : vector<128xf32>
    %7 = vector.multi_reduction <add>, %5, %cst_6 [0] : vector<104x128xf32> to vector<128xf32>
    %8 = vector.shape_cast %7 : vector<128xf32> to vector<1x128xf32>
    %9 = arith.addf %6, %8 : vector<1x128xf32>
    %c0_7 = arith.constant 0 : index
    %c0_8 = arith.constant 0 : index
    %10 = vector.load %arg4[%c0_7, %c0_8] : memref<8x128xf32, #tpu.memory_space<vmem>>, vector<1x128xf32>
    tpu.vector_store %arg4[%c0_7, %c0_8], %9 {strides = array<i32>} : memref<8x128xf32, #tpu.memory_space<vmem>>, vector<1x128xf32>,
    %c0_9 = arith.constant 0 : index
    %c0_10 = arith.constant 0 : index
    %11 = vector.load %arg5[%c0_9, %c0_10] : memref<8x128xf32, #tpu.memory_space<vmem>>, vector<1x128xf32>
    %12 = arith.mulf %5, %5 : vector<104x128xf32>
    %cst_11 = arith.constant dense<0.000000e+00> : vector<128xf32>
    %13 = vector.multi_reduction <add>, %12, %cst_11 [0] : vector<104x128xf32> to vector<128xf32>
    %14 = vector.shape_cast %13 : vector<128xf32> to vector<1x128xf32>
    %15 = arith.addf %11, %14 : vector<1x128xf32>
    %c0_12 = arith.constant 0 : index
    %c0_13 = arith.constant 0 : index
    %16 = vector.load %arg5[%c0_12, %c0_13] : memref<8x128xf32, #tpu.memory_space<vmem>>, vector<1x128xf32>
    tpu.vector_store %arg5[%c0_12, %c0_13], %15 {strides = array<i32>} : memref<8x128xf32, #tpu.memory_space<vmem>>, vector<1x128xf32>,
    return
  }
  func.func @transform_0(%arg0: i32, %arg1: i32) -> (i32, i32) {
    %c1_i32 = arith.constant 1 : i32
    %0 = arith.muli %arg0, %c1_i32 : i32
    %1 = arith.addi %0, %arg1 : i32
    %c0_i32 = arith.constant 0 : i32
    %c0_i32_0 = arith.constant 0 : i32
    return %1, %c0_i32 : i32, i32
  }
  func.func @transform_1(%arg0: i32, %arg1: i32) -> (i32, i32) {
    %c0_i32 = arith.constant 0 : i32
    %c0_i32_0 = arith.constant 0 : i32
    %c0_i32_1 = arith.constant 0 : i32
    return %c0_i32, %c0_i32_0 : i32, i32
  }
  func.func @transform_2(%arg0: i32, %arg1: i32) -> (i32, i32) {
    %c0_i32 = arith.constant 0 : i32
    %c0_i32_0 = arith.constant 0 : i32
    return %arg0, %c0_i32 : i32, i32
  }
  func.func @transform_3(%arg0: i32, %arg1: i32) -> (i32, i32) {
    %c0_i32 = arith.constant 0 : i32
    %c0_i32_0 = arith.constant 0 : i32
    return %arg0, %c0_i32 : i32, i32
  }
}

module attributes {stable_mosaic.version = 11 : i64} {
  func.func @_conv_affine_lrelu_kernel(%arg0: i32, %arg1: memref<104x128xbf16, #tpu.memory_space<vmem>>, %arg2: memref<128x128xbf16, #tpu.memory_space<vmem>>, %arg3: memref<1x128xf32, #tpu.memory_space<vmem>>, %arg4: memref<1x128xf32, #tpu.memory_space<vmem>>, %arg5: memref<104x128xf32, #tpu.memory_space<vmem>>) attributes {dimension_semantics = [#tpu.dimension_semantics<parallel>], iteration_bounds = array<i64: 2>, scalar_prefetch = 0 : i64, scratch_operands = 0 : i64, tpu.core_type = #tpu.core_type<tc>, window_params = [{transform_indices = @transform_0, window_bounds = array<i64: 104, 128>}, {pipeline_mode = #tpu.pipeline_mode<synchronous>, transform_indices = @transform_1, window_bounds = array<i64: 128, 128>}, {pipeline_mode = #tpu.pipeline_mode<synchronous>, transform_indices = @transform_2, window_bounds = array<i64: 1, 128>}, {pipeline_mode = #tpu.pipeline_mode<synchronous>, transform_indices = @transform_3, window_bounds = array<i64: 1, 128>}, {transform_indices = @transform_4, window_bounds = array<i64: 104, 128>}]} {
    %c0 = arith.constant 0 : index
    %c0_0 = arith.constant 0 : index
    %0 = vector.load %arg1[%c0, %c0_0] : memref<104x128xbf16, #tpu.memory_space<vmem>>, vector<104x128xbf16>
    %c0_1 = arith.constant 0 : index
    %c0_2 = arith.constant 0 : index
    %1 = vector.load %arg2[%c0_1, %c0_2] : memref<128x128xbf16, #tpu.memory_space<vmem>>, vector<128x128xbf16>
    %cst = arith.constant dense<0.000000e+00> : vector<104x128xf32>
    %2 = tpu.matmul %0, %1, %cst {dimension_numbers = #tpu.dot_dimension_numbers<[1], [0], [0], [1], [0, 0, 1, 1], [], []>} : vector<104x128xbf16>, vector<128x128xbf16>, vector<104x128xf32> -> vector<104x128xf32>
    %c0_3 = arith.constant 0 : index
    %c0_4 = arith.constant 0 : index
    %3 = vector.load %arg3[%c0_3, %c0_4] : memref<1x128xf32, #tpu.memory_space<vmem>>, vector<1x128xf32>
    %4 = vector.broadcast %3 : vector<1x128xf32> to vector<104x128xf32>
    %5 = arith.mulf %2, %4 : vector<104x128xf32>
    %c0_5 = arith.constant 0 : index
    %c0_6 = arith.constant 0 : index
    %6 = vector.load %arg4[%c0_5, %c0_6] : memref<1x128xf32, #tpu.memory_space<vmem>>, vector<1x128xf32>
    %7 = vector.broadcast %6 : vector<1x128xf32> to vector<104x128xf32>
    %8 = arith.addf %5, %7 : vector<104x128xf32>
    %cst_7 = arith.constant 0.000000e+00 : f32
    %9 = vector.broadcast %cst_7 : f32 to vector<104x128xf32>
    %10 = arith.cmpf oge, %8, %9 : vector<104x128xf32>
    %cst_8 = arith.constant 2.000000e-01 : f32
    %11 = vector.broadcast %cst_8 : f32 to vector<104x128xf32>
    %12 = arith.mulf %11, %8 : vector<104x128xf32>
    %13 = arith.select %10, %8, %12 : vector<104x128xi1>, vector<104x128xf32>
    %c0_9 = arith.constant 0 : index
    %c0_10 = arith.constant 0 : index
    %14 = vector.load %arg5[%c0_9, %c0_10] : memref<104x128xf32, #tpu.memory_space<vmem>>, vector<104x128xf32>
    tpu.vector_store %arg5[%c0_9, %c0_10], %13 {strides = array<i32>} : memref<104x128xf32, #tpu.memory_space<vmem>>, vector<104x128xf32>,
    return
  }
  func.func @transform_0(%arg0: i32) -> (i32, i32) {
    %c0_i32 = arith.constant 0 : i32
    %c0_i32_0 = arith.constant 0 : i32
    return %arg0, %c0_i32 : i32, i32
  }
  func.func @transform_1(%arg0: i32) -> (i32, i32) {
    %c0_i32 = arith.constant 0 : i32
    %c0_i32_0 = arith.constant 0 : i32
    %c0_i32_1 = arith.constant 0 : i32
    return %c0_i32, %c0_i32_0 : i32, i32
  }
  func.func @transform_2(%arg0: i32) -> (i32, i32) {
    %c0_i32 = arith.constant 0 : i32
    %c0_i32_0 = arith.constant 0 : i32
    %c0_i32_1 = arith.constant 0 : i32
    return %c0_i32, %c0_i32_0 : i32, i32
  }
  func.func @transform_3(%arg0: i32) -> (i32, i32) {
    %c0_i32 = arith.constant 0 : i32
    %c0_i32_0 = arith.constant 0 : i32
    %c0_i32_1 = arith.constant 0 : i32
    return %c0_i32, %c0_i32_0 : i32, i32
  }
  func.func @transform_4(%arg0: i32) -> (i32, i32) {
    %c0_i32 = arith.constant 0 : i32
    %c0_i32_0 = arith.constant 0 : i32
    return %arg0, %c0_i32 : i32, i32
  }
}

</mosaic_0001>

<llo_original>
// kernel: cnn_block_forward.3
$region0: #{cnn_block_forward.3}
  #allocation0 [shape = 'u32[]', space=smem, size = 0x4, offset = 0x4, fixed_abs, tag = 'smem constant byte address 0x4 - core index']
  #allocation1 [shape = 'u32[72,128]{1,0:T(1,128)}', space=vmem, size = 0x9000, scoped, tag = 'internal scratch']
  %s0 = inlined_call_operand.vmem [shape: bf16[208,128], index: 0, kind: input, shape index: {}]
  %s1 = inlined_call_operand.vmem [shape: bf16[128,128], index: 1, kind: input, shape index: {}]
  %s2 = inlined_call_operand.vmem [shape: f32[1,128], index: 2, kind: input, shape index: {}]
  %s3 = inlined_call_operand.vmem [shape: f32[1,128], index: 3, kind: input, shape index: {}]
  %s4 = inlined_call_operand.vmem [shape: f32[208,128], index: 4, kind: output, shape index: {}]
  %s5 = sld [smem:[#allocation0]]
  $region49: #{cnn_block_forward.3} parent=0
    _
  %s7 = ssub.s32 1, %s5
  %s8 = scalar_select 0, %s7, %s5
  loop: start=0, step=1, limit=4
  $region2: #{cnn_block_forward.3} parent=0 // loop_pre_header
    _
  $region3: #{cnn_block_forward.3} parent=0 // loop_header
    %s10 = sphi 0, %s14
    %p11 = scmp.ge.s32.totalorder %s10, 4
    %s20 = sphi 0, %s22
    %s23 = sphi 0, %s20
    %s24 = sphi 0, %s23
    %s40 = sphi 0, %s24
    %s44 = sphi 0, %s44
    %s46 = sphi 0, %s44
    %s47 = sphi 0, %s46
    %s61 = sphi 0, %s47
    %s65 = sphi 0, %s65
    %s67 = sphi 0, %s65
    %s68 = sphi 0, %s67
    %s82 = sphi 0, %s68
    %s86 = sphi 0, %s86
    %s88 = sphi 0, %s86
    %s89 = sphi 0, %s88
    %s103 = sphi 0, %s89
    %s109 = sphi 0, %s111
    %s112 = sphi 0, %s109
    %s113 = sphi 0, %s112
    %s129 = sphi 0, %s113
  $region4: #{cnn_block_forward.3} parent=0 // loop_header_branch
    %13 = sbr.rel (%p11) target = $region8
  $region5: #{cnn_block_forward.3} parent=0 // loop_body
    %s15 = ssub.s32 %s10, 1
    %s16 = ssub.s32 %s10, 2
    %s17 = sadd.s32 %s10, 1
    %s18 = ssub.s32 %s10, %s17
    %p19 = scmp.eq.s32.totalorder %s18, 0
    %s21 = sadd.s32 %s20, 1
    %s22 = scalar_select %p19, %s20, %s21
    %p25 = pneg %p19
    %p26 = scmp.eq.s32.totalorder %s10, 1
    %p27 = por %p25, %p26
    %p28 = scmp.ne.s32.totalorder %s20, %s23
    %p29 = scmp.eq.s32.totalorder %s10, 0
    %p30 = por %p28, %p29
    %p31 = scmp.ne.s32.totalorder %s20, %s23
    %p32 = scmp.eq.s32.totalorder %s15, 1
    %p33 = por %p31, %p32
    %p34 = scmp.ne.s32.totalorder %s23, %s24
    %p35 = scmp.eq.s32.totalorder %s15, 0
    %p36 = por %p34, %p35
    %p37 = scmp.ne.s32.totalorder %s23, %s24
    %p38 = scmp.eq.s32.totalorder %s16, 1
    %p39 = por %p37, %p38
    %p41 = scmp.ne.s32.totalorder %s24, %s40
    %p42 = scmp.eq.s32.totalorder %s16, 0
    %p43 = por %p41, %p42
    %s45 = sadd.s32 %s44, 1
    %p48 = scmp.eq.s32.totalorder %s10, 1
    %p49 = scmp.ne.s32.totalorder %s44, %s46
    %p50 = scmp.eq.s32.totalorder %s10, 0
    %p51 = por %p49, %p50
    %p52 = scmp.ne.s32.totalorder %s44, %s46
    %p53 = scmp.eq.s32.totalorder %s15, 1
    %p54 = por %p52, %p53
    %p55 = scmp.ne.s32.totalorder %s46, %s47
    %p56 = scmp.eq.s32.totalorder %s15, 0
    %p57 = por %p55, %p56
    %p58 = scmp.ne.s32.totalorder %s46, %s47
    %p59 = scmp.eq.s32.totalorder %s16, 1
    %p60 = por %p58, %p59
    %p62 = scmp.ne.s32.totalorder %s47, %s61
    %p63 = scmp.eq.s32.totalorder %s16, 0
    %p64 = por %p62, %p63
    %s66 = sadd.s32 %s65, 1
    %p69 = scmp.eq.s32.totalorder %s10, 1
    %p70 = scmp.ne.s32.totalorder %s65, %s67
    %p71 = scmp.eq.s32.totalorder %s10, 0
    %p72 = por %p70, %p71
    %p73 = scmp.ne.s32.totalorder %s65, %s67
    %p74 = scmp.eq.s32.totalorder %s15, 1
    %p75 = por %p73, %p74
    %p76 = scmp.ne.s32.totalorder %s67, %s68
    %p77 = scmp.eq.s32.totalorder %s15, 0
    %p78 = por %p76, %p77
    %p79 = scmp.ne.s32.totalorder %s67, %s68
    %p80 = scmp.eq.s32.totalorder %s16, 1
    %p81 = por %p79, %p80
    %p83 = scmp.ne.s32.totalorder %s68, %s82
    %p84 = scmp.eq.s32.totalorder %s16, 0
    %p85 = por %p83, %p84
    %s87 = sadd.s32 %s86, 1
    %p90 = scmp.eq.s32.totalorder %s10, 1
    %p91 = scmp.ne.s32.totalorder %s86, %s88
    %p92 = scmp.eq.s32.totalorder %s10, 0
    %p93 = por %p91, %p92
    %p94 = scmp.ne.s32.totalorder %s86, %s88
    %p95 = scmp.eq.s32.totalorder %s15, 1
    %p96 = por %p94, %p95
    %p97 = scmp.ne.s32.totalorder %s88, %s89
    %p98 = scmp.eq.s32.totalorder %s15, 0
    %p99 = por %p97, %p98
    %p100 = scmp.ne.s32.totalorder %s88, %s89
    %p101 = scmp.eq.s32.totalorder %s16, 1
    %p102 = por %p100, %p101
    %p104 = scmp.ne.s32.totalorder %s89, %s103
    %p105 = scmp.eq.s32.totalorder %s16, 0
    %p106 = por %p104, %p105
    %s107 = ssub.s32 %s10, %s17
    %p108 = scmp.eq.s32.totalorder %s107, 0
    %s110 = sadd.s32 %s109, 1
    %s111 = scalar_select %p108, %s109, %s110
    %p114 = pneg %p108
    %p115 = scmp.eq.s32.totalorder %s10, 1
    %p116 = por %p114, %p115
    %p117 = scmp.ne.s32.totalorder %s109, %s112
    %p118 = scmp.eq.s32.totalorder %s10, 0
    %p119 = por %p117, %p118
    %p120 = scmp.ne.s32.totalorder %s109, %s112
    %p121 = scmp.eq.s32.totalorder %s15, 1
    %p122 = por %p120, %p121
    %p123 = scmp.ne.s32.totalorder %s112, %s113
    %p124 = scmp.eq.s32.totalorder %s15, 0
    %p125 = por %p123, %p124
    %p126 = scmp.ne.s32.totalorder %s112, %s113
    %p127 = scmp.eq.s32.totalorder %s16, 1
    %p128 = por %p126, %p127
    %p130 = scmp.ne.s32.totalorder %s113, %s129
    %p131 = scmp.eq.s32.totalorder %s16, 0
    %p132 = por %p130, %p131
    %p133 = scmp.le.s32.totalorder 1, %s10
    %p134 = scmp.lt.s32.totalorder %s10, 3
    %p135 = pnand %p133, %p134
    %p136 = pneg %p135
    // Predicated region
    $region9: #{cnn_block_forward.3} parent=5 // pred_check
      _
    $region10: #{cnn_block_forward.3} parent=5 // pred_check_branch
      %138 = sbr.rel (%p135) target = $region12
    $region11: #{cnn_block_forward.3} parent=5 // pred_region
      %s139 = ssub.s32 %s10, 1
      // Predicated region
      $region13: #{cnn_block_forward.3} parent=11 // pred_check
        %p140 = pneg %p57
      $region14: #{cnn_block_forward.3} parent=11 // pred_check_branch
        %142 = sbr.rel (%p140) target = $region16
      $region15: #{cnn_block_forward.3} parent=11 // pred_region
        _
      $region16: #{cnn_block_forward.3} parent=11 // pred_fallthru
        _
      // Predicated region
      $region17: #{cnn_block_forward.3} parent=11 // pred_check
        %p143 = pneg %p78
      $region18: #{cnn_block_forward.3} parent=11 // pred_check_branch
        %145 = sbr.rel (%p143) target = $region20
      $region19: #{cnn_block_forward.3} parent=11 // pred_region
        _
      $region20: #{cnn_block_forward.3} parent=11 // pred_fallthru
        _
      // Predicated region
      $region21: #{cnn_block_forward.3} parent=11 // pred_check
        %p146 = pneg %p99
      $region22: #{cnn_block_forward.3} parent=11 // pred_check_branch
        %148 = sbr.rel (%p146) target = $region24
      $region23: #{cnn_block_forward.3} parent=11 // pred_region
        _
      $region24: #{cnn_block_forward.3} parent=11 // pred_fallthru
        _
    $region12: #{cnn_block_forward.3} parent=5 // pred_fallthru
      _
    %p149 = scmp.lt.s32.totalorder %s10, 2
    // Predicated region
    $region25: #{cnn_block_forward.3} parent=5 // pred_check
      %p150 = pneg %p149
    $region26: #{cnn_block_forward.3} parent=5 // pred_check_branch
      %152 = sbr.rel (%p150) target = $region28
    $region27: #{cnn_block_forward.3} parent=5 // pred_region
      // Predicated region
      $region29: #{cnn_block_forward.3} parent=27 // pred_check
        %p153 = pneg %p30
      $region30: #{cnn_block_forward.3} parent=27 // pred_check_branch
        %155 = sbr.rel (%p153) target = $region32
      $region31: #{cnn_block_forward.3} parent=27 // pred_region
        %s156 = smul.u32 13, %s10
        %p157 = scmp.lt.s32.totalorder %s156, 25
        %s158 = scalar_select %p157, %s156, 25
        %s159 = smul.addr %s158, 4
        %s160 = scalar_lea.vmem %s0, %s159
        %s161 = smul.u32 13, %s10
      $region32: #{cnn_block_forward.3} parent=27 // pred_fallthru
        _
    $region28: #{cnn_block_forward.3} parent=5 // pred_fallthru
      _
    %p162 = scmp.le.s32.totalorder 1, %s10
    %p163 = scmp.lt.s32.totalorder %s10, 3
    %p164 = pnand %p162, %p163
    %p165 = pneg %p164
    // Predicated region
    $region33: #{cnn_block_forward.3} parent=5 // pred_check
      _
    $region34: #{cnn_block_forward.3} parent=5 // pred_check_branch
      %167 = sbr.rel (%p164) target = $region36
    $region35: #{cnn_block_forward.3} parent=5 // pred_region
      %s168 = ssub.s32 %s10, 1
      %s169 = smul.u32 13, %s15
      %p170 = scmp.lt.s32.totalorder %s169, 25
      %s171 = scalar_select %p170, %s169, 25
      %s172 = smul.addr %s171, 4
      %s173 = scalar_lea.vmem %s0, %s172
      %p174 = pneg %p36
      %p175 = pneg %p33
      %p176 = pneg %p57
      %p177 = pneg %p54
      %p178 = pneg %p78
      %p179 = pneg %p75
      %p180 = pneg %p99
      %p181 = pneg %p96
      %p182 = pneg %p125
      %p183 = pneg %p122
      %s184 = smul.u32 13, %s15
      %p185 = scmp.lt.s32.totalorder %s184, 25
      %s186 = scalar_select %p185, %s184, 25
      %s187 = smul.addr %s186, 8
      %s188 = scalar_lea.vmem %s4, %s187
      %s189 = smul.u32 13, %s15
      %p190 = scmp.lt.s32.totalorder %s189, 25
      %s191 = scalar_select %p190, %s189, 25
      %s192 = smul.addr %s191, 4
      %s193 = scalar_lea.vmem %s0, %s192
      %s194 = smul.u32 13, %s15
      %s195 = smul.u32 13, %s15
      %p196 = scmp.lt.s32.totalorder %s195, 25
      %s197 = scalar_select %p196, %s195, 25
      %s198 = smul.addr %s197, 8
      %s199 = scalar_lea.vmem %s4, %s198
      %s200 = smul.u32 13, %s15
      %v201 = vld [vmem:[%s193] sm:$0xf]
      %v202 = vld [vmem:[%s193 + $0x4] sm:$0xf]
      %v203 = vld [vmem:[%s193 + $0x8] sm:$0xf]
      %v204 = vld [vmem:[%s193 + $0xc] sm:$0xf]
      %v205 = vld [vmem:[%s193 + $0x10] sm:$0xf]
      %v206 = vld [vmem:[%s193 + $0x14] sm:$0xf]
      %v207 = vld [vmem:[%s193 + $0x18] sm:$0xf]
      %v208 = vld [vmem:[%s193 + $0x1c] sm:$0xf]
      %v209 = vld [vmem:[%s193 + $0x20] sm:$0xf]
      %v210 = vld [vmem:[%s193 + $0x24] sm:$0xf]
      %v211 = vld [vmem:[%s193 + $0x28] sm:$0xf]
      %v212 = vld [vmem:[%s193 + $0x2c] sm:$0xf]
      %v213 = vld [vmem:[%s193 + $0x30] sm:$0xf]
      %v214 = vld [vmem:[%s1] sm:$0xf]
      %v215 = vld [vmem:[%s1 + $0x4] sm:$0xf]
      %v216 = vld [vmem:[%s1 + $0x8] sm:$0xf]
      %v217 = vld [vmem:[%s1 + $0xc] sm:$0xf]
      %v218 = vld [vmem:[%s1 + $0x10] sm:$0xf]
      %v219 = vld [vmem:[%s1 + $0x14] sm:$0xf]
      %v220 = vld [vmem:[%s1 + $0x18] sm:$0xf]
      %v221 = vld [vmem:[%s1 + $0x1c] sm:$0xf]
      %v222 = vld [vmem:[%s1 + $0x20] sm:$0xf]
      %v223 = vld [vmem:[%s1 + $0x24] sm:$0xf]
      %v224 = vld [vmem:[%s1 + $0x28] sm:$0xf]
      %v225 = vld [vmem:[%s1 + $0x2c] sm:$0xf]
      %v226 = vld [vmem:[%s1 + $0x30] sm:$0xf]
      %v227 = vld [vmem:[%s1 + $0x34] sm:$0xf]
      %v228 = vld [vmem:[%s1 + $0x38] sm:$0xf]
      %v229 = vld [vmem:[%s1 + $0x3c] sm:$0xf]
      %v243 = vunpack.c.l.b16 %v201
      %v244 = vunpack.c.l.b16 %v202
      %v245 = vunpack.c.l.b16 %v203
      %v246 = vunpack.c.l.b16 %v204
      %v247 = vunpack.c.l.b16 %v205
      %v248 = vunpack.c.l.b16 %v206
      %v249 = vunpack.c.l.b16 %v207
      %v250 = vunpack.c.l.b16 %v208
      %v251 = vunpack.c.l.b16 %v209
      %v252 = vunpack.c.l.b16 %v210
      %v253 = vunpack.c.l.b16 %v211
      %v254 = vunpack.c.l.b16 %v212
      %v255 = vunpack.c.l.b16 %v213
      %v256 = vpack.c.b16 %v244, %v243
      %v257 = vpack.c.b16 %v246, %v245
      %v258 = vpack.c.b16 %v248, %v247
      %v259 = vpack.c.b16 %v250, %v249
      %v260 = vpack.c.b16 %v252, %v251
      %v261 = vpack.c.b16 %v254, %v253
      %v262 = vpack.c.b16 %v255, %v255
      %v286 = vunpack.c.l.b16 %v214
      %v287 = vunpack.c.l.b16 %v215
      %v288 = vunpack.c.l.b16 %v216
      %v289 = vunpack.c.l.b16 %v217
      %v290 = vunpack.c.l.b16 %v218
      %v291 = vunpack.c.l.b16 %v219
      %v292 = vunpack.c.l.b16 %v220
      %v293 = vunpack.c.l.b16 %v221
      %v294 = vunpack.c.l.b16 %v222
      %v295 = vunpack.c.l.b16 %v223
      %v296 = vunpack.c.l.b16 %v224
      %v297 = vunpack.c.l.b16 %v225
      %v298 = vunpack.c.l.b16 %v226
      %v299 = vunpack.c.l.b16 %v227
      %v300 = vunpack.c.l.b16 %v228
      %v301 = vunpack.c.l.b16 %v229
      %v302 = vpack.c.b16 %v287, %v286
      %v303 = vpack.c.b16 %v289, %v288
      %v304 = vpack.c.b16 %v291, %v290
      %v305 = vpack.c.b16 %v293, %v292
      %v306 = vpack.c.b16 %v295, %v294
      %v307 = vpack.c.b16 %v297, %v296
      %v308 = vpack.c.b16 %v299, %v298
      %v309 = vpack.c.b16 %v301, %v300
      %318 = vmatpush.bf16.msra.mxu0 %v309
      %319 = vmatpush.bf16.msra.mxu0 %v308
      %320 = vmatpush.bf16.msra.mxu0 %v307
      %321 = vmatpush.bf16.msra.mxu0 %v306
      %322 = vmatpush.bf16.msra.mxu0 %v305
      %323 = vmatpush.bf16.msra.mxu0 %v304
      %324 = vmatpush.bf16.msra.mxu0 %v303
      %325 = vmatpush.bf16.msra.mxu0 %v302
      %326 = vmatmul.bf16.gmra.mxu0 %v256
      %v327 = vpop.f32.mrf.mxu0
      %v328 = vadd.f32 0.0, %v327
      %v329 = vpop.f32.mrf.mxu0
      %v330 = vadd.f32 0.0, %v329
      %331 = vmatmul.bf16.gmra.mxu0 %v257
      %v332 = vpop.f32.mrf.mxu0
      %v333 = vadd.f32 0.0, %v332
      %v334 = vpop.f32.mrf.mxu0
      %v335 = vadd.f32 0.0, %v334
      %336 = vmatmul.bf16.gmra.mxu0 %v258
      %v337 = vpop.f32.mrf.mxu0
      %v338 = vadd.f32 0.0, %v337
      %v339 = vpop.f32.mrf.mxu0
      %v340 = vadd.f32 0.0, %v339
      %341 = vmatmul.bf16.gmra.mxu0 %v259
      %v342 = vpop.f32.mrf.mxu0
      %v343 = vadd.f32 0.0, %v342
      %v344 = vpop.f32.mrf.mxu0
      %v345 = vadd.f32 0.0, %v344
      %346 = vmatmul.bf16.gmra.mxu0 %v260
      %v347 = vpop.f32.mrf.mxu0
      %v348 = vadd.f32 0.0, %v347
      %v349 = vpop.f32.mrf.mxu0
      %v350 = vadd.f32 0.0, %v349
      %351 = vmatmul.bf16.gmra.mxu0 %v261
      %v352 = vpop.f32.mrf.mxu0
      %v353 = vadd.f32 0.0, %v352
      %v354 = vpop.f32.mrf.mxu0
      %v355 = vadd.f32 0.0, %v354
      %356 = vmatmul.bf16.gmra.mxu0 %v262
      %v357 = vpop.f32.mrf.mxu0
      %v358 = vadd.f32 0.0, %v357
      %v359 = vpop.f32.mrf.mxu0
      %360 = vdwg.mxu0
      %v361 = vld [vmem:[%s2] sm:$0x1]
      %v363 = vperm.slane %v361, 0
      %v365 = vmul.f32 %v328, %v363
      %v366 = vmul.f32 %v330, %v363
      %v367 = vmul.f32 %v333, %v363
      %v368 = vmul.f32 %v335, %v363
      %v369 = vmul.f32 %v338, %v363
      %v370 = vmul.f32 %v340, %v363
      %v371 = vmul.f32 %v343, %v363
      %v372 = vmul.f32 %v345, %v363
      %v373 = vmul.f32 %v348, %v363
      %v374 = vmul.f32 %v350, %v363
      %v375 = vmul.f32 %v353, %v363
      %v376 = vmul.f32 %v355, %v363
      %v377 = vmul.f32 %v358, %v363
      %v378 = vld [vmem:[%s3] sm:$0x1]
      %v380 = vperm.slane %v378, 0
      %v382 = vadd.f32 %v365, %v380
      %v383 = vadd.f32 %v366, %v380
      %v384 = vadd.f32 %v367, %v380
      %v385 = vadd.f32 %v368, %v380
      %v386 = vadd.f32 %v369, %v380
      %v387 = vadd.f32 %v370, %v380
      %v388 = vadd.f32 %v371, %v380
      %v389 = vadd.f32 %v372, %v380
      %v390 = vadd.f32 %v373, %v380
      %v391 = vadd.f32 %v374, %v380
      %v392 = vadd.f32 %v375, %v380
      %v393 = vadd.f32 %v376, %v380
      %v394 = vadd.f32 %v377, %v380
      %vm395 = vcmp.ge.f32.partialorder %v382, 0.0
      %vm396 = vcmp.ge.f32.partialorder %v383, 0.0
      %vm397 = vcmp.ge.f32.partialorder %v384, 0.0
      %vm398 = vcmp.ge.f32.partialorder %v385, 0.0
      %vm399 = vcmp.ge.f32.partialorder %v386, 0.0
      %vm400 = vcmp.ge.f32.partialorder %v387, 0.0
      %vm401 = vcmp.ge.f32.partialorder %v388, 0.0
      %vm402 = vcmp.ge.f32.partialorder %v389, 0.0
      %vm403 = vcmp.ge.f32.partialorder %v390, 0.0
      %vm404 = vcmp.ge.f32.partialorder %v391, 0.0
      %vm405 = vcmp.ge.f32.partialorder %v392, 0.0
      %vm406 = vcmp.ge.f32.partialorder %v393, 0.0
      %vm407 = vcmp.ge.f32.partialorder %v394, 0.0
      %v408 = vmul.f32 %v382, 0.2
      %v409 = vmul.f32 %v383, 0.2
      %v410 = vmul.f32 %v384, 0.2
      %v411 = vmul.f32 %v385, 0.2
      %v412 = vmul.f32 %v386, 0.2
      %v413 = vmul.f32 %v387, 0.2
      %v414 = vmul.f32 %v388, 0.2
      %v415 = vmul.f32 %v389, 0.2
      %v416 = vmul.f32 %v390, 0.2
      %v417 = vmul.f32 %v391, 0.2
      %v418 = vmul.f32 %v392, 0.2
      %v419 = vmul.f32 %v393, 0.2
      %v420 = vmul.f32 %v394, 0.2
      %v421 = vsel %vm395, %v382, %v408
      %v422 = vsel %vm396, %v383, %v409
      %v423 = vsel %vm397, %v384, %v410
      %v424 = vsel %vm398, %v385, %v411
      %v425 = vsel %vm399, %v386, %v412
      %v426 = vsel %vm400, %v387, %v413
      %v427 = vsel %vm401, %v388, %v414
      %v428 = vsel %vm402, %v389, %v415
      %v429 = vsel %vm403, %v390, %v416
      %v430 = vsel %vm404, %v391, %v417
      %v431 = vsel %vm405, %v392, %v418
      %v432 = vsel %vm406, %v393, %v419
      %v433 = vsel %vm407, %v394, %v420
      %434 = vst [vmem:[%s199] sm:$0xff] %v421
      %435 = vst [vmem:[%s199 + $0x8] sm:$0xff] %v422
      %436 = vst [vmem:[%s199 + $0x10] sm:$0xff] %v423
      %437 = vst [vmem:[%s199 + $0x18] sm:$0xff] %v424
      %438 = vst [vmem:[%s199 + $0x20] sm:$0xff] %v425
      %439 = vst [vmem:[%s199 + $0x28] sm:$0xff] %v426
      %440 = vst [vmem:[%s199 + $0x30] sm:$0xff] %v427
      %441 = vst [vmem:[%s199 + $0x38] sm:$0xff] %v428
      %442 = vst [vmem:[%s199 + $0x40] sm:$0xff] %v429
      %443 = vst [vmem:[%s199 + $0x48] sm:$0xff] %v430
      %444 = vst [vmem:[%s199 + $0x50] sm:$0xff] %v431
      %445 = vst [vmem:[%s199 + $0x58] sm:$0xff] %v432
      %446 = vst [vmem:[%s199 + $0x60] sm:$0xff] %v433
      %s447 = smul.u32 13, %s15
      %p448 = scmp.lt.s32.totalorder %s447, 25
      %s449 = scalar_select %p448, %s447, 25
      %s450 = smul.addr %s449, 8
      %s451 = scalar_lea.vmem %s4, %s450
      // Predicated region
      $region37: #{cnn_block_forward.3} parent=35 // pred_check
        %p452 = pneg %p122
      $region38: #{cnn_block_forward.3} parent=35 // pred_check_branch
        %454 = sbr.rel (%p452) target = $region40
      $region39: #{cnn_block_forward.3} parent=35 // pred_region
        %s455 = smul.u32 13, %s15
      $region40: #{cnn_block_forward.3} parent=35 // pred_fallthru
        _
    $region36: #{cnn_block_forward.3} parent=5 // pred_fallthru
      _
    %p456 = scmp.le.s32.totalorder 2, %s10
    // Predicated region
    $region41: #{cnn_block_forward.3} parent=5 // pred_check
      %p457 = pneg %p456
    $region42: #{cnn_block_forward.3} parent=5 // pred_check_branch
      %459 = sbr.rel (%p457) target = $region44
    $region43: #{cnn_block_forward.3} parent=5 // pred_region
      %s460 = ssub.s32 %s10, 2
      // Predicated region
      $region45: #{cnn_block_forward.3} parent=43 // pred_check
        %p461 = pneg %p128
      $region46: #{cnn_block_forward.3} parent=43 // pred_check_branch
        %463 = sbr.rel (%p461) target = $region48
      $region47: #{cnn_block_forward.3} parent=43 // pred_region
        %s464 = smul.u32 13, %s16
        %p465 = scmp.lt.s32.totalorder %s464, 25
        %s466 = scalar_select %p465, %s464, 25
        %s467 = smul.addr %s466, 8
        %s468 = scalar_lea.vmem %s4, %s467
      $region48: #{cnn_block_forward.3} parent=43 // pred_fallthru
        _
    $region44: #{cnn_block_forward.3} parent=5 // pred_fallthru
      _
  $region6: #{cnn_block_forward.3} parent=0 // loop_footer
    %s14 = sadd.s32 1, %s10
  $region7: #{cnn_block_forward.3} parent=0 // loop_footer_branch
    %9 = sbr.rel target = $region3
  $region8: #{cnn_block_forward.3} parent=0 // loop_exit
    _

// kernel: cnn_block_forward.2
$region0: #{cnn_block_forward.2}
  #allocation0 [shape = 'u32[]', space=smem, size = 0x4, offset = 0x4, fixed_abs, tag = 'smem constant byte address 0x4 - core index']
  #allocation1 [shape = 'u32[72,128]{1,0:T(1,128)}', space=vmem, size = 0x9000, scoped, tag = 'internal scratch']
  %s0 = inlined_call_operand.vmem [shape: bf16[208,128], index: 0, kind: input, shape index: {}]
  %s1 = inlined_call_operand.vmem [shape: bf16[128,128], index: 1, kind: input, shape index: {}]
  %s2 = inlined_call_operand.vmem [shape: f32[16,128], index: 2, kind: output, shape index: {0}]
  %s3 = inlined_call_operand.vmem [shape: f32[16,128], index: 3, kind: output, shape index: {1}]
  %4 = xla_tuple %s2, %s3
  %s5 = sld [smem:[#allocation0]]
  $region53: #{cnn_block_forward.2} parent=0
    _
  %s7 = ssub.s32 1, %s5
  %s8 = scalar_select 0, %s7, %s5
  loop: start=0, step=1, limit=4
  $region2: #{cnn_block_forward.2} parent=0 // loop_pre_header
    _
  $region3: #{cnn_block_forward.2} parent=0 // loop_header
    %s10 = sphi 0, %s14
    %p11 = scmp.ge.s32.totalorder %s10, 4
    %s17 = sphi 0, %s29
    %s18 = sphi 0, %s25
    %s19 = sphi 0, %s17
    %s20 = sphi 0, %s18
    %s21 = sphi 0, %s19
    %s22 = sphi 0, %s20
    %s34 = sphi 0, %s36
    %s37 = sphi 0, %s34
    %s38 = sphi 0, %s37
    %s54 = sphi 0, %s38
    %s58 = sphi 0, %s58
    %s60 = sphi 0, %s58
    %s61 = sphi 0, %s60
    %s75 = sphi 0, %s61
    %s81 = sphi 0, %s83
    %s84 = sphi 0, %s81
    %s85 = sphi 0, %s84
    %s101 = sphi 0, %s85
    %s107 = sphi 0, %s109
    %s110 = sphi 0, %s107
    %s111 = sphi 0, %s110
    %s127 = sphi 0, %s111
  $region4: #{cnn_block_forward.2} parent=0 // loop_header_branch
    %13 = sbr.rel (%p11) target = $region8
  $region5: #{cnn_block_forward.2} parent=0 // loop_body
    %s15 = ssub.s32 %s10, 1
    %s16 = ssub.s32 %s10, 2
    %s23 = sadd.s32 1, %s18
    %p24 = scmp.ge.s32.totalorder %s23, 1
    %s25 = scalar_select %p24, 0, %s23
    %s26 = sadd.s32 1, %s17
    %s27 = scalar_select %p24, %s26, %s17
    %p28 = scmp.ge.s32.totalorder %s27, 2
    %s29 = scalar_select %p28, 0, %s27
    %s30 = sadd.s32 %s17, %s18
    %s31 = sadd.s32 %s29, %s25
    %s32 = ssub.s32 %s30, %s31
    %p33 = scmp.eq.s32.totalorder %s32, 0
    %s35 = sadd.s32 %s34, 1
    %s36 = scalar_select %p33, %s34, %s35
    %p39 = pneg %p33
    %p40 = scmp.eq.s32.totalorder %s10, 1
    %p41 = por %p39, %p40
    %p42 = scmp.ne.s32.totalorder %s34, %s37
    %p43 = scmp.eq.s32.totalorder %s10, 0
    %p44 = por %p42, %p43
    %p45 = scmp.ne.s32.totalorder %s34, %s37
    %p46 = scmp.eq.s32.totalorder %s15, 1
    %p47 = por %p45, %p46
    %p48 = scmp.ne.s32.totalorder %s37, %s38
    %p49 = scmp.eq.s32.totalorder %s15, 0
    %p50 = por %p48, %p49
    %p51 = scmp.ne.s32.totalorder %s37, %s38
    %p52 = scmp.eq.s32.totalorder %s16, 1
    %p53 = por %p51, %p52
    %p55 = scmp.ne.s32.totalorder %s38, %s54
    %p56 = scmp.eq.s32.totalorder %s16, 0
    %p57 = por %p55, %p56
    %s59 = sadd.s32 %s58, 1
    %p62 = scmp.eq.s32.totalorder %s10, 1
    %p63 = scmp.ne.s32.totalorder %s58, %s60
    %p64 = scmp.eq.s32.totalorder %s10, 0
    %p65 = por %p63, %p64
    %p66 = scmp.ne.s32.totalorder %s58, %s60
    %p67 = scmp.eq.s32.totalorder %s15, 1
    %p68 = por %p66, %p67
    %p69 = scmp.ne.s32.totalorder %s60, %s61
    %p70 = scmp.eq.s32.totalorder %s15, 0
    %p71 = por %p69, %p70
    %p72 = scmp.ne.s32.totalorder %s60, %s61
    %p73 = scmp.eq.s32.totalorder %s16, 1
    %p74 = por %p72, %p73
    %p76 = scmp.ne.s32.totalorder %s61, %s75
    %p77 = scmp.eq.s32.totalorder %s16, 0
    %p78 = por %p76, %p77
    %s79 = ssub.s32 %s17, %s29
    %p80 = scmp.eq.s32.totalorder %s79, 0
    %s82 = sadd.s32 %s81, 1
    %s83 = scalar_select %p80, %s81, %s82
    %p86 = pneg %p80
    %p87 = scmp.eq.s32.totalorder %s10, 1
    %p88 = por %p86, %p87
    %p89 = scmp.ne.s32.totalorder %s81, %s84
    %p90 = scmp.eq.s32.totalorder %s10, 0
    %p91 = por %p89, %p90
    %p92 = scmp.ne.s32.totalorder %s81, %s84
    %p93 = scmp.eq.s32.totalorder %s15, 1
    %p94 = por %p92, %p93
    %p95 = scmp.ne.s32.totalorder %s84, %s85
    %p96 = scmp.eq.s32.totalorder %s15, 0
    %p97 = por %p95, %p96
    %p98 = scmp.ne.s32.totalorder %s84, %s85
    %p99 = scmp.eq.s32.totalorder %s16, 1
    %p100 = por %p98, %p99
    %p102 = scmp.ne.s32.totalorder %s85, %s101
    %p103 = scmp.eq.s32.totalorder %s16, 0
    %p104 = por %p102, %p103
    %s105 = ssub.s32 %s17, %s29
    %p106 = scmp.eq.s32.totalorder %s105, 0
    %s108 = sadd.s32 %s107, 1
    %s109 = scalar_select %p106, %s107, %s108
    %p112 = pneg %p106
    %p113 = scmp.eq.s32.totalorder %s10, 1
    %p114 = por %p112, %p113
    %p115 = scmp.ne.s32.totalorder %s107, %s110
    %p116 = scmp.eq.s32.totalorder %s10, 0
    %p117 = por %p115, %p116
    %p118 = scmp.ne.s32.totalorder %s107, %s110
    %p119 = scmp.eq.s32.totalorder %s15, 1
    %p120 = por %p118, %p119
    %p121 = scmp.ne.s32.totalorder %s110, %s111
    %p122 = scmp.eq.s32.totalorder %s15, 0
    %p123 = por %p121, %p122
    %p124 = scmp.ne.s32.totalorder %s110, %s111
    %p125 = scmp.eq.s32.totalorder %s16, 1
    %p126 = por %p124, %p125
    %p128 = scmp.ne.s32.totalorder %s111, %s127
    %p129 = scmp.eq.s32.totalorder %s16, 0
    %p130 = por %p128, %p129
    %p131 = scmp.le.s32.totalorder 1, %s10
    %p132 = scmp.lt.s32.totalorder %s10, 3
    %p133 = pnand %p131, %p132
    %p134 = pneg %p133
    // Predicated region
    $region9: #{cnn_block_forward.2} parent=5 // pred_check
      _
    $region10: #{cnn_block_forward.2} parent=5 // pred_check_branch
      %136 = sbr.rel (%p133) target = $region12
    $region11: #{cnn_block_forward.2} parent=5 // pred_region
      %s137 = ssub.s32 %s10, 1
      // Predicated region
      $region13: #{cnn_block_forward.2} parent=11 // pred_check
        %p138 = pneg %p71
      $region14: #{cnn_block_forward.2} parent=11 // pred_check_branch
        %140 = sbr.rel (%p138) target = $region16
      $region15: #{cnn_block_forward.2} parent=11 // pred_region
        _
      $region16: #{cnn_block_forward.2} parent=11 // pred_fallthru
        _
    $region12: #{cnn_block_forward.2} parent=5 // pred_fallthru
      _
    %p141 = scmp.lt.s32.totalorder %s10, 2
    // Predicated region
    $region17: #{cnn_block_forward.2} parent=5 // pred_check
      %p142 = pneg %p141
    $region18: #{cnn_block_forward.2} parent=5 // pred_check_branch
      %144 = sbr.rel (%p142) target = $region20
    $region19: #{cnn_block_forward.2} parent=5 // pred_region
      // Predicated region
      $region21: #{cnn_block_forward.2} parent=19 // pred_check
        %p145 = pneg %p44
      $region22: #{cnn_block_forward.2} parent=19 // pred_check_branch
        %147 = sbr.rel (%p145) target = $region24
      $region23: #{cnn_block_forward.2} parent=19 // pred_region
        %s148 = sadd.s32 %s17, %s18
        %s149 = smul.u32 13, %s148
        %p150 = scmp.lt.s32.totalorder %s149, 25
        %s151 = scalar_select %p150, %s149, 25
        %s152 = smul.addr %s151, 4
        %s153 = scalar_lea.vmem %s0, %s152
        %s154 = sadd.s32 %s17, %s18
        %s155 = smul.u32 13, %s154
      $region24: #{cnn_block_forward.2} parent=19 // pred_fallthru
        _
    $region20: #{cnn_block_forward.2} parent=5 // pred_fallthru
      _
    %p156 = scmp.le.s32.totalorder 1, %s10
    %p157 = scmp.lt.s32.totalorder %s10, 3
    %p158 = pnand %p156, %p157
    %p159 = pneg %p158
    // Predicated region
    $region25: #{cnn_block_forward.2} parent=5 // pred_check
      _
    $region26: #{cnn_block_forward.2} parent=5 // pred_check_branch
      %161 = sbr.rel (%p158) target = $region28
    $region27: #{cnn_block_forward.2} parent=5 // pred_region
      %s162 = ssub.s32 %s10, 1
      %s163 = sadd.s32 %s19, %s20
      %s164 = smul.u32 13, %s163
      %p165 = scmp.lt.s32.totalorder %s164, 25
      %s166 = scalar_select %p165, %s164, 25
      %s167 = smul.addr %s166, 4
      %s168 = scalar_lea.vmem %s0, %s167
      %p169 = pneg %p50
      %p170 = pneg %p47
      %p171 = pneg %p71
      %p172 = pneg %p68
      %p173 = pneg %p97
      %p174 = pneg %p94
      %p175 = scmp.lt.s32.totalorder %s19, 1
      %s176 = scalar_select %p175, %s19, 1
      %s177 = smul.addr %s176, 8
      %s178 = scalar_lea.vmem %s2, %s177
      %p179 = pneg %p123
      %p180 = pneg %p120
      %p181 = scmp.lt.s32.totalorder %s19, 1
      %s182 = scalar_select %p181, %s19, 1
      %s183 = smul.addr %s182, 8
      %s184 = scalar_lea.vmem %s3, %s183
      %s185 = sadd.s32 %s19, %s20
      %s186 = smul.u32 13, %s185
      %p187 = scmp.lt.s32.totalorder %s186, 25
      %s188 = scalar_select %p187, %s186, 25
      %s189 = smul.addr %s188, 4
      %s190 = scalar_lea.vmem %s0, %s189
      %s191 = sadd.s32 %s19, %s20
      %s192 = smul.u32 13, %s191
      %p193 = scmp.lt.s32.totalorder %s19, 1
      %s194 = scalar_select %p193, %s19, 1
      %s195 = smul.addr %s194, 8
      %s196 = scalar_lea.vmem %s2, %s195
      %p197 = scmp.lt.s32.totalorder %s19, 1
      %s198 = scalar_select %p197, %s19, 1
      %s199 = smul.addr %s198, 8
      %s200 = scalar_lea.vmem %s3, %s199
      %p201 = scmp.eq.s32.totalorder %s20, 0
      // Predicated region
      $region29: #{cnn_block_forward.2} parent=27 // pred_check
        %p202 = pneg %p201
      $region30: #{cnn_block_forward.2} parent=27 // pred_check_branch
        %204 = sbr.rel (%p202) target = $region32
      $region31: #{cnn_block_forward.2} parent=27 // pred_region
        %205 = vst [vmem:[%s196] sm:$0xff] 0.0
        %206 = vst [vmem:[%s200] sm:$0xff] 0.0
      $region32: #{cnn_block_forward.2} parent=27 // pred_fallthru
        _
      %v207 = vld [vmem:[%s190] sm:$0xf]
      %v208 = vld [vmem:[%s190 + $0x4] sm:$0xf]
      %v209 = vld [vmem:[%s190 + $0x8] sm:$0xf]
      %v210 = vld [vmem:[%s190 + $0xc] sm:$0xf]
      %v211 = vld [vmem:[%s190 + $0x10] sm:$0xf]
      %v212 = vld [vmem:[%s190 + $0x14] sm:$0xf]
      %v213 = vld [vmem:[%s190 + $0x18] sm:$0xf]
      %v214 = vld [vmem:[%s190 + $0x1c] sm:$0xf]
      %v215 = vld [vmem:[%s190 + $0x20] sm:$0xf]
      %v216 = vld [vmem:[%s190 + $0x24] sm:$0xf]
      %v217 = vld [vmem:[%s190 + $0x28] sm:$0xf]
      %v218 = vld [vmem:[%s190 + $0x2c] sm:$0xf]
      %v219 = vld [vmem:[%s190 + $0x30] sm:$0xf]
      %v220 = vld [vmem:[%s1] sm:$0xf]
      %v221 = vld [vmem:[%s1 + $0x4] sm:$0xf]
      %v222 = vld [vmem:[%s1 + $0x8] sm:$0xf]
      %v223 = vld [vmem:[%s1 + $0xc] sm:$0xf]
      %v224 = vld [vmem:[%s1 + $0x10] sm:$0xf]
      %v225 = vld [vmem:[%s1 + $0x14] sm:$0xf]
      %v226 = vld [vmem:[%s1 + $0x18] sm:$0xf]
      %v227 = vld [vmem:[%s1 + $0x1c] sm:$0xf]
      %v228 = vld [vmem:[%s1 + $0x20] sm:$0xf]
      %v229 = vld [vmem:[%s1 + $0x24] sm:$0xf]
      %v230 = vld [vmem:[%s1 + $0x28] sm:$0xf]
      %v231 = vld [vmem:[%s1 + $0x2c] sm:$0xf]
      %v232 = vld [vmem:[%s1 + $0x30] sm:$0xf]
      %v233 = vld [vmem:[%s1 + $0x34] sm:$0xf]
      %v234 = vld [vmem:[%s1 + $0x38] sm:$0xf]
      %v235 = vld [vmem:[%s1 + $0x3c] sm:$0xf]
      %v249 = vunpack.c.l.b16 %v207
      %v250 = vunpack.c.l.b16 %v208
      %v251 = vunpack.c.l.b16 %v209
      %v252 = vunpack.c.l.b16 %v210
      %v253 = vunpack.c.l.b16 %v211
      %v254 = vunpack.c.l.b16 %v212
      %v255 = vunpack.c.l.b16 %v213
      %v256 = vunpack.c.l.b16 %v214
      %v257 = vunpack.c.l.b16 %v215
      %v258 = vunpack.c.l.b16 %v216
      %v259 = vunpack.c.l.b16 %v217
      %v260 = vunpack.c.l.b16 %v218
      %v261 = vunpack.c.l.b16 %v219
      %v262 = vpack.c.b16 %v250, %v249
      %v263 = vpack.c.b16 %v252, %v251
      %v264 = vpack.c.b16 %v254, %v253
      %v265 = vpack.c.b16 %v256, %v255
      %v266 = vpack.c.b16 %v258, %v257
      %v267 = vpack.c.b16 %v260, %v259
      %v268 = vpack.c.b16 %v261, %v261
      %v292 = vunpack.c.l.b16 %v220
      %v293 = vunpack.c.l.b16 %v221
      %v294 = vunpack.c.l.b16 %v222
      %v295 = vunpack.c.l.b16 %v223
      %v296 = vunpack.c.l.b16 %v224
      %v297 = vunpack.c.l.b16 %v225
      %v298 = vunpack.c.l.b16 %v226
      %v299 = vunpack.c.l.b16 %v227
      %v300 = vunpack.c.l.b16 %v228
      %v301 = vunpack.c.l.b16 %v229
      %v302 = vunpack.c.l.b16 %v230
      %v303 = vunpack.c.l.b16 %v231
      %v304 = vunpack.c.l.b16 %v232
      %v305 = vunpack.c.l.b16 %v233
      %v306 = vunpack.c.l.b16 %v234
      %v307 = vunpack.c.l.b16 %v235
      %v308 = vpack.c.b16 %v293, %v292
      %v309 = vpack.c.b16 %v295, %v294
      %v310 = vpack.c.b16 %v297, %v296
      %v311 = vpack.c.b16 %v299, %v298
      %v312 = vpack.c.b16 %v301, %v300
      %v313 = vpack.c.b16 %v303, %v302
      %v314 = vpack.c.b16 %v305, %v304
      %v315 = vpack.c.b16 %v307, %v306
      %324 = vmatpush.bf16.msra.mxu0 %v315
      %325 = vmatpush.bf16.msra.mxu0 %v314
      %326 = vmatpush.bf16.msra.mxu0 %v313
      %327 = vmatpush.bf16.msra.mxu0 %v312
      %328 = vmatpush.bf16.msra.mxu0 %v311
      %329 = vmatpush.bf16.msra.mxu0 %v310
      %330 = vmatpush.bf16.msra.mxu0 %v309
      %331 = vmatpush.bf16.msra.mxu0 %v308
      %332 = vmatmul.bf16.gmra.mxu0 %v262
      %v333 = vpop.f32.mrf.mxu0
      %v334 = vadd.f32 0.0, %v333
      %v335 = vpop.f32.mrf.mxu0
      %v336 = vadd.f32 0.0, %v335
      %337 = vmatmul.bf16.gmra.mxu0 %v263
      %v338 = vpop.f32.mrf.mxu0
      %v339 = vadd.f32 0.0, %v338
      %v340 = vpop.f32.mrf.mxu0
      %v341 = vadd.f32 0.0, %v340
      %342 = vmatmul.bf16.gmra.mxu0 %v264
      %v343 = vpop.f32.mrf.mxu0
      %v344 = vadd.f32 0.0, %v343
      %v345 = vpop.f32.mrf.mxu0
      %v346 = vadd.f32 0.0, %v345
      %347 = vmatmul.bf16.gmra.mxu0 %v265
      %v348 = vpop.f32.mrf.mxu0
      %v349 = vadd.f32 0.0, %v348
      %v350 = vpop.f32.mrf.mxu0
      %v351 = vadd.f32 0.0, %v350
      %352 = vmatmul.bf16.gmra.mxu0 %v266
      %v353 = vpop.f32.mrf.mxu0
      %v354 = vadd.f32 0.0, %v353
      %v355 = vpop.f32.mrf.mxu0
      %v356 = vadd.f32 0.0, %v355
      %357 = vmatmul.bf16.gmra.mxu0 %v267
      %v358 = vpop.f32.mrf.mxu0
      %v359 = vadd.f32 0.0, %v358
      %v360 = vpop.f32.mrf.mxu0
      %v361 = vadd.f32 0.0, %v360
      %362 = vmatmul.bf16.gmra.mxu0 %v268
      %v363 = vpop.f32.mrf.mxu0
      %v364 = vadd.f32 0.0, %v363
      %v365 = vpop.f32.mrf.mxu0
      %366 = vdwg.mxu0
      %v367 = vld [vmem:[%s196] sm:$0x1]
      %v368 = vadd.f32 %v334, %v336
      %v369 = vadd.f32 %v368, %v339
      %v370 = vadd.f32 %v369, %v341
      %v371 = vadd.f32 %v370, %v344
      %v372 = vadd.f32 %v371, %v346
      %v373 = vadd.f32 %v372, %v349
      %v374 = vadd.f32 %v373, %v351
      %v375 = vadd.f32 %v374, %v354
      %v376 = vadd.f32 %v375, %v356
      %v377 = vadd.f32 %v376, %v359
      %v378 = vadd.f32 %v377, %v361
      %v379 = vadd.f32 %v378, %v364
      %v380 = vrot.slane %v379, 4
      %v381 = vadd.f32 %v379, %v380
      %v382 = vrot.slane %v381, 2
      %v383 = vadd.f32 %v381, %v382
      %v384 = vrot.slane %v383, 1
      %v385 = vadd.f32 %v383, %v384
      %v386 = vadd.f32 %v367, %v385
      %387 = vst [vmem:[%s196] sm:$0x1] %v386
      %v388 = vld [vmem:[%s200] sm:$0x1]
      %v389 = vmul.f32 %v334, %v334
      %v390 = vmul.f32 %v336, %v336
      %v391 = vmul.f32 %v339, %v339
      %v392 = vmul.f32 %v341, %v341
      %v393 = vmul.f32 %v344, %v344
      %v394 = vmul.f32 %v346, %v346
      %v395 = vmul.f32 %v349, %v349
      %v396 = vmul.f32 %v351, %v351
      %v397 = vmul.f32 %v354, %v354
      %v398 = vmul.f32 %v356, %v356
      %v399 = vmul.f32 %v359, %v359
      %v400 = vmul.f32 %v361, %v361
      %v401 = vmul.f32 %v364, %v364
      %v402 = vadd.f32 %v389, %v390
      %v403 = vadd.f32 %v402, %v391
      %v404 = vadd.f32 %v403, %v392
      %v405 = vadd.f32 %v404, %v393
      %v406 = vadd.f32 %v405, %v394
      %v407 = vadd.f32 %v406, %v395
      %v408 = vadd.f32 %v407, %v396
      %v409 = vadd.f32 %v408, %v397
      %v410 = vadd.f32 %v409, %v398
      %v411 = vadd.f32 %v410, %v399
      %v412 = vadd.f32 %v411, %v400
      %v413 = vadd.f32 %v412, %v401
      %v414 = vrot.slane %v413, 4
      %v415 = vadd.f32 %v413, %v414
      %v416 = vrot.slane %v415, 2
      %v417 = vadd.f32 %v415, %v416
      %v418 = vrot.slane %v417, 1
      %v419 = vadd.f32 %v417, %v418
      %v420 = vadd.f32 %v388, %v419
      %421 = vst [vmem:[%s200] sm:$0x1] %v420
      %p422 = scmp.lt.s32.totalorder %s19, 1
      %s423 = scalar_select %p422, %s19, 1
      %s424 = smul.addr %s423, 8
      %s425 = scalar_lea.vmem %s2, %s424
      %p426 = scmp.lt.s32.totalorder %s19, 1
      %s427 = scalar_select %p426, %s19, 1
      %s428 = smul.addr %s427, 8
      %s429 = scalar_lea.vmem %s3, %s428
      // Predicated region
      $region33: #{cnn_block_forward.2} parent=27 // pred_check
        %p430 = pneg %p94
      $region34: #{cnn_block_forward.2} parent=27 // pred_check_branch
        %432 = sbr.rel (%p430) target = $region36
      $region35: #{cnn_block_forward.2} parent=27 // pred_region
        _
      $region36: #{cnn_block_forward.2} parent=27 // pred_fallthru
        _
      // Predicated region
      $region37: #{cnn_block_forward.2} parent=27 // pred_check
        %p433 = pneg %p120
      $region38: #{cnn_block_forward.2} parent=27 // pred_check_branch
        %435 = sbr.rel (%p433) target = $region40
      $region39: #{cnn_block_forward.2} parent=27 // pred_region
        _
      $region40: #{cnn_block_forward.2} parent=27 // pred_fallthru
        _
    $region28: #{cnn_block_forward.2} parent=5 // pred_fallthru
      _
    %p436 = scmp.le.s32.totalorder 2, %s10
    // Predicated region
    $region41: #{cnn_block_forward.2} parent=5 // pred_check
      %p437 = pneg %p436
    $region42: #{cnn_block_forward.2} parent=5 // pred_check_branch
      %439 = sbr.rel (%p437) target = $region44
    $region43: #{cnn_block_forward.2} parent=5 // pred_region
      %s440 = ssub.s32 %s10, 2
      // Predicated region
      $region45: #{cnn_block_forward.2} parent=43 // pred_check
        %p441 = pneg %p100
      $region46: #{cnn_block_forward.2} parent=43 // pred_check_branch
        %443 = sbr.rel (%p441) target = $region48
      $region47: #{cnn_block_forward.2} parent=43 // pred_region
        %p444 = scmp.lt.s32.totalorder %s21, 1
        %s445 = scalar_select %p444, %s21, 1
        %s446 = smul.addr %s445, 8
        %s447 = scalar_lea.vmem %s2, %s446
      $region48: #{cnn_block_forward.2} parent=43 // pred_fallthru
        _
      // Predicated region
      $region49: #{cnn_block_forward.2} parent=43 // pred_check
        %p448 = pneg %p126
      $region50: #{cnn_block_forward.2} parent=43 // pred_check_branch
        %450 = sbr.rel (%p448) target = $region52
      $region51: #{cnn_block_forward.2} parent=43 // pred_region
        %p451 = scmp.lt.s32.totalorder %s21, 1
        %s452 = scalar_select %p451, %s21, 1
        %s453 = smul.addr %s452, 8
        %s454 = scalar_lea.vmem %s3, %s453
      $region52: #{cnn_block_forward.2} parent=43 // pred_fallthru
        _
    $region44: #{cnn_block_forward.2} parent=5 // pred_fallthru
      _
  $region6: #{cnn_block_forward.2} parent=0 // loop_footer
    %s14 = sadd.s32 1, %s10
  $region7: #{cnn_block_forward.2} parent=0 // loop_footer_branch
    %9 = sbr.rel target = $region3
  $region8: #{cnn_block_forward.2} parent=0 // loop_exit
    _

</llo_original>
